<compile_context>
chip_gen: v5e
topology: v5e:2x2
jax: 0.10.0
libtpu: 0.0.40
codegen_flags: <defaults>
</compile_context>

<pallas_src>
import functools

import numpy as np
import jax
import jax.numpy as jnp
from jax.experimental import pallas as pl
from jax.experimental.pallas import tpu as pltpu

_LANES = 128
_SUBLANES = 8


# ----------------------------------------------------------------------------
# kernel
# ----------------------------------------------------------------------------
def _mapping_kernel(idx_ref, out_ref, *, table):
    """out[r, l] = table[idx[r, l]] via independent masked terms (VPU only).

    idx_ref : VMEM (block_rows, 128), arriving dtype (int or float)
    out_ref : VMEM (block_rows, 128) float32
    table   : static Python tuple of floats (atom type -> atomic number)
    """
    idx = idx_ref[...]
    if jnp.issubdtype(idx.dtype, jnp.floating):
        # matches torch's node_gt.long() truncation; in-kernel cast is free-ish
        idx = idx.astype(jnp.int32)

    num_types = len(table)
    n_parts = min(4, num_types) if num_types > 0 else 1
    parts = [jnp.zeros(idx.shape, jnp.float32) for _ in range(n_parts)]
    for k in range(num_types):            # K is tiny; independent terms co-issue
        val = jnp.float32(table[k])
        parts[k % n_parts] = parts[k % n_parts] + jnp.where(idx == k, val, 0.0)

    acc = parts[0]
    for p in parts[1:]:
        acc = acc + p
    out_ref[...] = acc


# ----------------------------------------------------------------------------
# wrapper
# ----------------------------------------------------------------------------
def _round_up(x, m):
    return ((x + m - 1) // m) * m


def make_mapping_block(atom_type_to_atomic_number, *, max_block_rows=2048):
    """Build a Pallas-backed forward equivalent to MappingBlock.forward."""
    num_types = len(atom_type_to_atomic_number)
    table = [-1.0] * num_types
    for key, value in atom_type_to_atomic_number.items():
        table[int(key)] = float(value)
    table = tuple(table)

    def forward(node_gt):
        orig_shape = jnp.shape(node_gt)
        x = jnp.asarray(node_gt)
        # Only narrow 64-bit inputs (x64 mode); the common int32/float32 path
        # has NO wrapper-side cast pass.
        if x.dtype.itemsize == 8:
            x = x.astype(
                jnp.float32 if jnp.issubdtype(x.dtype, jnp.floating) else jnp.int32
            )
        idx = x.reshape(-1)
        n = int(idx.shape[0])

        # lane-dense (rows, 128); rows padded only to a multiple of 8
        rows = max(pl.cdiv(n, _LANES), 1)
        rows = _round_up(rows, _SUBLANES)
        n_pad = rows * _LANES

        # choose the row tile: big tiles, but keep grid >= 2 when the input
        # allows so both v7x TensorCores (and megacore parts) share the work
        if rows > max_block_rows:
            block_rows = max_block_rows
        elif rows >= 2 * _SUBLANES:
            block_rows = _round_up(pl.cdiv(rows, 2), _SUBLANES)
        else:
            block_rows = rows
        grid = pl.cdiv(rows, block_rows)     # partial last block handled by Pallas

        if n_pad != n:
            idx = jnp.pad(idx, (0, n_pad - n))
        idx2d = idx.reshape(rows, _LANES)
        # TODO(synk): if the caller can keep node_gt lane-dense (rows, 128) and
        # in int8/int16 end-to-end, the pad/reshape passes and 4x input bytes
        # disappear; here we accept the module's flat-vector interface.

        in_bytes = jnp.dtype(idx2d.dtype).itemsize
        cost = pl.CostEstimate(
            flops=2 * max(num_types, 1) * rows * _LANES,
            transcendentals=0,
            bytes_accessed=rows * _LANES * (in_bytes + 4),
        )

        out2d = pl.pallas_call(
            functools.partial(_mapping_kernel, table=table),
            grid=(grid,),
            in_specs=[pl.BlockSpec((block_rows, _LANES), lambda i: (i, 0))],
            out_specs=pl.BlockSpec((block_rows, _LANES), lambda i: (i, 0)),
            out_shape=jax.ShapeDtypeStruct((rows, _LANES), jnp.float32),
            compiler_params=pltpu.CompilerParams(
                dimension_semantics=("parallel",),
            ),
            cost_estimate=cost,
        )(idx2d)

        return out2d.reshape(n_pad)[:n].reshape(orig_shape)

    return forward


def build_mapping_tensor(atom_type_to_atomic_number):
    """Same construction as the torch module (for the pure-JAX reference)."""
    k = len(atom_type_to_atomic_number)
    m = np.full((k,), -1.0, dtype=np.float32)
    for key, value in atom_type_to_atomic_number.items():
        m[key] = float(value)
    return jnp.asarray(m)


# ----------------------------------------------------------------------------
if __name__ == "__main__":
    # atom type -> atomic number (H, C, N, O, F), as in the torch module
    atom_type_to_atomic_number = {0: 1, 1: 6, 2: 7, 3: 8, 4: 9}
    mapping_tensor = build_mapping_tensor(atom_type_to_atomic_number)
    forward = make_mapping_block(atom_type_to_atomic_number)

    key = jax.random.PRNGKey(0)
    k1, k2 = jax.random.split(key)

    # small, exercises padding; node_gt may arrive as float (reference uses .long())
    num_nodes = 37
    node_gt_int = jax.random.randint(k1, (num_nodes,), 0, len(atom_type_to_atomic_number))
    node_gt_float = node_gt_int.astype(jnp.float32)

    out_int = jax.block_until_ready(forward(node_gt_int))
    out_float = jax.block_until_ready(forward(node_gt_float))
    ref = jnp.take(mapping_tensor, node_gt_int, axis=0)

    assert out_int.shape == (num_nodes,) and out_int.dtype == jnp.float32
    assert jnp.allclose(out_int, ref)
    assert jnp.allclose(out_float, ref)

    # larger input: exercises grid >= 2 and the partial boundary block
    num_nodes2 = 5000
    node_gt2 = jax.random.randint(k2, (num_nodes2,), 0, len(atom_type_to_atomic_number))
    out2 = jax.block_until_ready(forward(node_gt2))
    ref2 = jnp.take(mapping_tensor, node_gt2, axis=0)
    assert out2.shape == (num_nodes2,)
    assert jnp.allclose(out2, ref2)

    print("KERNEL_OK")
</pallas_src>

<mosaic_0001>
module attributes {stable_mosaic.version = 11 : i64} {
  func.func @_mapping_kernel(%arg0: i32, %arg1: memref<8x128xi32, #tpu.memory_space<vmem>>, %arg2: memref<8x128xf32, #tpu.memory_space<vmem>>) attributes {dimension_semantics = [#tpu.dimension_semantics<parallel>], iteration_bounds = array<i64: 1>, scalar_prefetch = 0 : i64, scratch_operands = 0 : i64, tpu.core_type = #tpu.core_type<tc>, window_params = [{transform_indices = @transform_0, window_bounds = array<i64: 8, 128>}, {transform_indices = @transform_1, window_bounds = array<i64: 8, 128>}]} {
    %c0 = arith.constant 0 : index
    %c0_0 = arith.constant 0 : index
    %0 = vector.load %arg1[%c0, %c0_0] : memref<8x128xi32, #tpu.memory_space<vmem>>, vector<8x128xi32>
    %cst = arith.constant 0.000000e+00 : f32
    %1 = vector.broadcast %cst : f32 to vector<8x128xf32>
    %cst_1 = arith.constant 0.000000e+00 : f32
    %2 = vector.broadcast %cst_1 : f32 to vector<8x128xf32>
    %cst_2 = arith.constant 0.000000e+00 : f32
    %3 = vector.broadcast %cst_2 : f32 to vector<8x128xf32>
    %cst_3 = arith.constant 0.000000e+00 : f32
    %4 = vector.broadcast %cst_3 : f32 to vector<8x128xf32>
    %c0_i32 = arith.constant 0 : i32
    %5 = vector.broadcast %c0_i32 : i32 to vector<8x128xi32>
    %6 = arith.cmpi eq, %0, %5 : vector<8x128xi32>
    %cst_4 = arith.constant 1.000000e+00 : f32
    %cst_5 = arith.constant 0.000000e+00 : f32
    %7 = vector.broadcast %cst_4 : f32 to vector<8x128xf32>
    %8 = vector.broadcast %cst_5 : f32 to vector<8x128xf32>
    %9 = arith.select %6, %7, %8 : vector<8x128xi1>, vector<8x128xf32>
    %10 = arith.addf %1, %9 : vector<8x128xf32>
    %c1_i32 = arith.constant 1 : i32
    %11 = vector.broadcast %c1_i32 : i32 to vector<8x128xi32>
    %12 = arith.cmpi eq, %0, %11 : vector<8x128xi32>
    %cst_6 = arith.constant 6.000000e+00 : f32
    %cst_7 = arith.constant 0.000000e+00 : f32
    %13 = vector.broadcast %cst_6 : f32 to vector<8x128xf32>
    %14 = vector.broadcast %cst_7 : f32 to vector<8x128xf32>
    %15 = arith.select %12, %13, %14 : vector<8x128xi1>, vector<8x128xf32>
    %16 = arith.addf %2, %15 : vector<8x128xf32>
    %c2_i32 = arith.constant 2 : i32
    %17 = vector.broadcast %c2_i32 : i32 to vector<8x128xi32>
    %18 = arith.cmpi eq, %0, %17 : vector<8x128xi32>
    %cst_8 = arith.constant 7.000000e+00 : f32
    %cst_9 = arith.constant 0.000000e+00 : f32
    %19 = vector.broadcast %cst_8 : f32 to vector<8x128xf32>
    %20 = vector.broadcast %cst_9 : f32 to vector<8x128xf32>
    %21 = arith.select %18, %19, %20 : vector<8x128xi1>, vector<8x128xf32>
    %22 = arith.addf %3, %21 : vector<8x128xf32>
    %c3_i32 = arith.constant 3 : i32
    %23 = vector.broadcast %c3_i32 : i32 to vector<8x128xi32>
    %24 = arith.cmpi eq, %0, %23 : vector<8x128xi32>
    %cst_10 = arith.constant 8.000000e+00 : f32
    %cst_11 = arith.constant 0.000000e+00 : f32
    %25 = vector.broadcast %cst_10 : f32 to vector<8x128xf32>
    %26 = vector.broadcast %cst_11 : f32 to vector<8x128xf32>
    %27 = arith.select %24, %25, %26 : vector<8x128xi1>, vector<8x128xf32>
    %28 = arith.addf %4, %27 : vector<8x128xf32>
    %c4_i32 = arith.constant 4 : i32
    %29 = vector.broadcast %c4_i32 : i32 to vector<8x128xi32>
    %30 = arith.cmpi eq, %0, %29 : vector<8x128xi32>
    %cst_12 = arith.constant 9.000000e+00 : f32
    %cst_13 = arith.constant 0.000000e+00 : f32
    %31 = vector.broadcast %cst_12 : f32 to vector<8x128xf32>
    %32 = vector.broadcast %cst_13 : f32 to vector<8x128xf32>
    %33 = arith.select %30, %31, %32 : vector<8x128xi1>, vector<8x128xf32>
    %34 = arith.addf %10, %33 : vector<8x128xf32>
    %35 = arith.addf %34, %16 : vector<8x128xf32>
    %36 = arith.addf %35, %22 : vector<8x128xf32>
    %37 = arith.addf %36, %28 : vector<8x128xf32>
    %c0_14 = arith.constant 0 : index
    %c0_15 = arith.constant 0 : index
    %38 = vector.load %arg2[%c0_14, %c0_15] : memref<8x128xf32, #tpu.memory_space<vmem>>, vector<8x128xf32>
    tpu.vector_store %arg2[%c0_14, %c0_15], %37 {strides = array<i32>} : memref<8x128xf32, #tpu.memory_space<vmem>>, vector<8x128xf32>,
    return
  }
  func.func @transform_0(%arg0: i32) -> (i32, i32) {
    %c0_i32 = arith.constant 0 : i32
    %c0_i32_0 = arith.constant 0 : i32
    return %arg0, %c0_i32 : i32, i32
  }
  func.func @transform_1(%arg0: i32) -> (i32, i32) {
    %c0_i32 = arith.constant 0 : i32
    %c0_i32_0 = arith.constant 0 : i32
    return %arg0, %c0_i32 : i32, i32
  }
}

</mosaic_0001>

<llo_original>
// kernel: tpu_custom_call.1
$region0: #{tpu_custom_call.1}
  #allocation0 [shape = 'u32[]', space=smem, size = 0x4, offset = 0x4, fixed_abs, tag = 'smem constant byte address 0x4 - core index']
  #allocation1 [shape = 'u32[72,128]{1,0:T(1,128)}', space=vmem, size = 0x9000, scoped, tag = 'internal scratch']
  %s0 = inlined_call_operand.hbm [shape: s32[8,128], index: 0, kind: input, shape index: {}]
  %s1 = inlined_call_operand.hbm [shape: f32[8,128], index: 1, kind: output, shape index: {}]
  %s2 = sld [smem:[#allocation0]]
  $region18: #{tpu_custom_call.1} parent=0
    _
  %s4 = ssub.s32 1, %s2
  %s5 = scalar_select 0, %s4, %s2
  $region1: #{tpu_custom_call.1} parent=0
    #allocation2 [shape = 'u8[4096]{0}', space=vmem, size = 0x1000, scoped, tag = 'input window, operand 0, single buffered']
    #allocation3 [shape = 's32[1]{0}', space=sflag, size = 0x4, scoped, tag = 'scoped memory for tpu_custom_call.1']
    #allocation4 [shape = 's32[1]{0}', space=sflag, size = 0x4, scoped, tag = 'scoped memory for tpu_custom_call.1']
    #allocation5 [shape = 'u8[4096]{0}', space=vmem, size = 0x1000, scoped, tag = 'output window, operand 0, single buffered']
    %6 = vsyncpa [#allocation3], 0
    %7 = vsyncpa [#allocation4], 0
    // Predicated region
    $region2: #{tpu_custom_call.1} parent=1 // pred_check
      _
    $region3: #{tpu_custom_call.1} parent=1 // pred_check_branch
      %9 = sbr.rel (0) target = $region5
    $region4: #{tpu_custom_call.1} parent=1 // pred_region
      %11 = vsyncadd [#allocation3], 0
      %s13 = sshll.u32 %s0, 4
      %s14 = int_to_ptr.hbm [resolvable:$true] %s13
      %s15 = sshll.u32 [#allocation2], 4
      %s16 = int_to_ptr.vmem [resolvable:$true] %s15
      %18 = dma.hbm_to_vmem [thread:$0]  %s14, 128, %s16, [#allocation3]
    $region5: #{tpu_custom_call.1} parent=1 // pred_fallthru
      _
    // Predicated region
    $region6: #{tpu_custom_call.1} parent=1 // pred_check
      _
    $region7: #{tpu_custom_call.1} parent=1 // pred_check_branch
      %20 = sbr.rel (0) target = $region9
    $region8: #{tpu_custom_call.1} parent=1 // pred_region
      %22 = dma.done [#allocation3], 128
    $region9: #{tpu_custom_call.1} parent=1 // pred_fallthru
      _
    %v23 = vld [vmem:[#allocation2] sm:$0xff]
    %vm24 = vcmp.eq.s32.totalorder %v23, 0
    %v25 = vsel %vm24, 1.0, 0.0
    %v26 = vadd.f32 %v25, 0.0
    %vm27 = vcmp.eq.s32.totalorder %v23, 1
    %v28 = vsel %vm27, 6.0, 0.0
    %v29 = vadd.f32 %v28, 0.0
    %vm30 = vcmp.eq.s32.totalorder %v23, 2
    %v31 = vsel %vm30, 7.0, 0.0
    %v32 = vadd.f32 %v31, 0.0
    %vm33 = vcmp.eq.s32.totalorder %v23, 3
    %v34 = vsel %vm33, 8.0, 0.0
    %v35 = vadd.f32 %v34, 0.0
    %vm36 = vcmp.eq.s32.totalorder %v23, 4
    %v37 = vsel %vm36, 9.0, 0.0
    %v38 = vadd.f32 %v26, %v37
    %v39 = vadd.f32 %v38, %v29
    %v40 = vadd.f32 %v39, %v32
    %v41 = vadd.f32 %v40, %v35
    %42 = vst [vmem:[#allocation5] sm:$0xff] %v41
    // Predicated region
    $region10: #{tpu_custom_call.1} parent=1 // pred_check
      _
    $region11: #{tpu_custom_call.1} parent=1 // pred_check_branch
      %44 = sbr.rel (0) target = $region13
    $region12: #{tpu_custom_call.1} parent=1 // pred_region
      %46 = vsyncadd [#allocation4], 0
      %s48 = sshll.u32 [#allocation5], 4
      %s49 = int_to_ptr.vmem [resolvable:$true] %s48
      %s50 = sshll.u32 %s1, 4
      %s51 = int_to_ptr.hbm [resolvable:$true] %s50
      %53 = dma.vmem_to_hbm [thread:$0]  %s49, 128, %s51, [#allocation4]
    $region13: #{tpu_custom_call.1} parent=1 // pred_fallthru
      _
    // Predicated region
    $region14: #{tpu_custom_call.1} parent=1 // pred_check
      _
    $region15: #{tpu_custom_call.1} parent=1 // pred_check_branch
      %55 = sbr.rel (0) target = $region17
    $region16: #{tpu_custom_call.1} parent=1 // pred_region
      %57 = dma.done [#allocation4], 128
    $region17: #{tpu_custom_call.1} parent=1 // pred_fallthru
      _
    %58 = vsyncpa [#allocation3], 1
    %59 = vsyncpa [#allocation4], 1

</llo_original>
